<compile_context>
chip_gen: v7x
topology: tpu7x:2x2x1
jax: 0.10.0
libtpu: 0.0.40
codegen_flags: <defaults>
</compile_context>

<pallas_src>
import functools

import jax
import jax.numpy as jnp
from jax import lax
from jax.experimental import pallas as pl
from jax.experimental.pallas import tpu as pltpu


_LANE = 128
_SUBLANE = 8
# Fuse the last-patch select into the kernel only while streaming the whole
# (row, feat, num_patch) block is cheaper than an extra HBM round-trip of the
# sliced bf16 slab (strided HBM reads fetch ~a burst per element anyway).
_FUSE_MAX_PATCH = 32


def _round_up(v, m):
    return ((v + m - 1) // m) * m


@functools.lru_cache(maxsize=1)
def _vmem_capacity_bytes():
    try:
        cap = getattr(pltpu.get_tpu_info(), "vmem_capacity_bytes", None)
        if cap:
            return int(cap)
    except Exception:
        pass
    return 64 << 20  # conservative default: v7x per-TensorCore VMEM


def prepare_head_params(weight, bias, *, param_dtype=jnp.bfloat16):
    """One-time param prep (hoisted out of the per-call hot path).

    weight: torch layout [n_classes, feat]; bias: [n_classes].
    Returns (w_t_padded [feat, c_pad] in param_dtype, bias_padded [1, c_pad] f32).
    Pass param_dtype=jnp.float32 for exact nn.Linear numerics (precision knob).
    """
    n_classes, feat = weight.shape
    c_pad = _round_up(n_classes, _LANE)
    w_t = jnp.zeros((feat, c_pad), dtype=param_dtype)
    w_t = w_t.at[:, :n_classes].set(weight.T.astype(param_dtype))
    b_p = jnp.zeros((1, c_pad), dtype=jnp.float32)
    b_p = b_p.at[:, :n_classes].set(bias.astype(jnp.float32))
    return w_t, b_p


def _make_kernel(fused, nk, patch_idx):
    """Builds the kernel body for (fused last-patch select?, #K tiles)."""

    def _x_last(x_ref, w_dtype):
        if fused:
            # x_ref: [tm, tk, num_patch] in the input dtype. Select the last
            # patch with a masked lane-reduction (exact: all other lanes are
            # zeroed via where before the sum). Avoids any cross-lane/sublane
            # relayout and keeps feat on the lane axis for the MXU.
            blk = x_ref[...]
            pidx = lax.broadcasted_iota(jnp.int32, blk.shape, blk.ndim - 1)
            sel = jnp.where(pidx == patch_idx, blk, jnp.zeros_like(blk))
            xl = jnp.sum(sel, axis=-1)  # [tm, tk]
        else:
            xl = x_ref[...]             # [tm, tk], already cast by the wrapper
        return xl.astype(w_dtype)

    if nk == 1:
        def kernel(x_ref, w_ref, b_ref, o_ref):
            xl = _x_last(x_ref, w_ref.dtype)
            acc = jnp.dot(xl, w_ref[...], preferred_element_type=jnp.float32)
            o_ref[...] = (acc + b_ref[...]).astype(o_ref.dtype)
    else:
        def kernel(x_ref, w_ref, b_ref, o_ref, acc_ref):
            k = pl.program_id(1)

            @pl.when(k == 0)
            def _init():
                acc_ref[...] = jnp.zeros_like(acc_ref)

            xl = _x_last(x_ref, w_ref.dtype)
            acc_ref[...] += jnp.dot(xl, w_ref[...],
                                    preferred_element_type=jnp.float32)

            @pl.when(k == pl.num_programs(1) - 1)
            def _finalize():
                o_ref[...] = (acc_ref[...] + b_ref[...]).astype(o_ref.dtype)

    return kernel


def _choose_nk(feat, c_pad, w_itemsize, fused, budget, requested):
    """Pick the K (feature-axis) split so the weight block fits VMEM."""
    align = _SUBLANE if fused else _LANE

    def _valid(nk):
        if nk < 1 or feat % nk != 0:
            return False
        tk = feat // nk
        return tk == feat or tk % align == 0

    if requested is not None and _valid(int(requested)):
        return int(requested)

    # Resident weight is fine while its (double-buffered) block stays under
    # ~half the VMEM budget; otherwise split the feature axis (v7x headroom).
    target = budget // 2
    best = 1
    for nk in range(1, feat + 1):
        if not _valid(nk):
            continue
        best = nk
        if 2 * (feat // nk) * c_pad * w_itemsize <= target:
            break
    return best


@functools.partial(
    jax.jit,
    static_argnames=("n_classes", "fused", "k_split", "max_rows_per_tile"))
def _forward(x, w_prepped, b_prepped, *, n_classes, fused, k_split,
             max_rows_per_tile):
    bs, nvars, d_model, num_patch = x.shape
    feat = nvars * d_model
    c_pad = w_prepped.shape[1]
    assert w_prepped.shape[0] == feat
    w_itemsize = w_prepped.dtype.itemsize
    out_dtype = x.dtype
    out_itemsize = jnp.dtype(out_dtype).itemsize

    # Dropout: identity in eval mode.
    # TODO(synk): training-mode dropout (random mask + 1/(1-p) scaling) not implemented.

    fuse = bool(fused) and num_patch <= _FUSE_MAX_PATCH

    if fuse:
        # Free (contiguous) reshape -- no HBM pass; select + cast run in-kernel.
        x_in = x.reshape(bs, feat, num_patch)
        x_itemsize = x.dtype.itemsize
    else:
        # Long patch axis: one fused XLA slice+reshape+cast pass (small slab),
        # kernel then streams the 2-D bf16 activations.
        # TODO(synk): a 1-wide strided patch BlockSpec would avoid this pass but
        # violates the (8,128) block-shape rule on TPU.
        x_in = x[:, :, :, -1].reshape(bs, feat).astype(w_prepped.dtype)
        x_itemsize = w_itemsize

    budget = int(_vmem_capacity_bytes() * 0.75)

    nk = _choose_nk(feat, c_pad, w_itemsize, fuse, budget, k_split)
    tk = feat // nk

    # VMEM footprint model (double-buffered pipeline stages, lane/sublane padding).
    if fuse:
        x_row = _round_up(tk, _SUBLANE) * _round_up(num_patch, _LANE) * x_itemsize
    else:
        x_row = _round_up(tk, _LANE) * x_itemsize
    out_row = c_pad * out_itemsize
    acc_row = c_pad * 4 if nk > 1 else 0
    fixed = 2 * tk * c_pad * w_itemsize + 2 * c_pad * 4
    per_row = 2 * x_row + 2 * out_row + acc_row

    tm_cap = max((budget - fixed) // per_row, 16)
    if max_rows_per_tile is not None:
        tm_cap = min(tm_cap, int(max_rows_per_tile))
    # Fused blocks carry the (lane-padded) patch axis: keep the tile bounded.
    tm_cap = min(tm_cap, 256 if fuse else 1024)

    if tm_cap >= bs:
        tm = bs
        # v7x megacore: split a single batch tile in two so both TensorCores
        # get work, unless the weight stream would dominate the re-fetch cost.
        if bs >= 128 and nk == 1 and tk * c_pad * w_itemsize <= (4 << 20):
            tm = min(bs, _round_up(-(-bs // 2), 16))
    else:
        # Multiple-of-16 rows: keeps bf16 sublane packing dense (v5e) and
        # satisfies the sublane divisibility rule for the output block.
        tm = max((tm_cap // 16) * 16, 16)
    num_m = -(-bs // tm)

    if fuse:
        if nk == 1:
            x_spec = pl.BlockSpec((tm, feat, num_patch), lambda i: (i, 0, 0))
        else:
            x_spec = pl.BlockSpec((tm, tk, num_patch), lambda i, k: (i, k, 0))
    else:
        if nk == 1:
            x_spec = pl.BlockSpec((tm, feat), lambda i: (i, 0))
        else:
            x_spec = pl.BlockSpec((tm, tk), lambda i, k: (i, k))

    if nk == 1:
        grid = (num_m,)
        w_spec = pl.BlockSpec((feat, c_pad), lambda i: (0, 0))
        b_spec = pl.BlockSpec((1, c_pad), lambda i: (0, 0))
        o_spec = pl.BlockSpec((tm, c_pad), lambda i: (i, 0))
        scratch = ()
        dims = ("parallel",)
    else:
        grid = (num_m, nk)
        w_spec = pl.BlockSpec((tk, c_pad), lambda i, k: (k, 0))
        b_spec = pl.BlockSpec((1, c_pad), lambda i, k: (0, 0))
        o_spec = pl.BlockSpec((tm, c_pad), lambda i, k: (i, 0))
        scratch = (pltpu.VMEM((tm, c_pad), jnp.float32),)
        dims = ("parallel", "arbitrary")

    est = fixed + tm * per_row
    vmem_limit = min(max(2 * est + (4 << 20), 32 << 20),
                     int(_vmem_capacity_bytes() * 0.9))

    kernel = _make_kernel(fuse, nk, num_patch - 1)
    out = pl.pallas_call(
        kernel,
        out_shape=jax.ShapeDtypeStruct((bs, c_pad), out_dtype),
        grid=grid,
        in_specs=[x_spec, w_spec, b_spec],
        out_specs=o_spec,
        scratch_shapes=scratch,
        compiler_params=pltpu.CompilerParams(
            dimension_semantics=dims,
            vmem_limit_bytes=vmem_limit),
    )(x_in, w_prepped, b_prepped)

    # Drop zero-padded class columns (output already in final dtype).
    return out[:, :n_classes]


_FUSE_OK = {}


def classification_head(x, w_prepped, b_prepped, *, n_classes,
                        k_split=None, max_rows_per_tile=None):
    """Forward pass of the PatchTST ClassificationHead (eval mode).

    x: [bs, nvars, d_model, num_patch]; returns [bs, n_classes] in x.dtype.
    """
    sig = (x.shape, str(x.dtype), w_prepped.shape, str(w_prepped.dtype),
           n_classes, k_split, max_rows_per_tile)
    run = functools.partial(_forward, x, w_prepped, b_prepped,
                            n_classes=n_classes, k_split=k_split,
                            max_rows_per_tile=max_rows_per_tile)
    fused = _FUSE_OK.get(sig)
    if fused is not None:
        return run(fused=fused)
    # First call for this signature: probe the fused (in-kernel last-patch
    # select) path once; fall back to the pre-sliced path if lowering rejects it.
    try:
        out = jax.block_until_ready(run(fused=True))
        _FUSE_OK[sig] = True
        return out
    except Exception:
        _FUSE_OK[sig] = False
        return run(fused=False)


if __name__ == "__main__":
    # Small shapes consistent with the module.
    bs, n_vars, d_model, num_patch = 2, 4, 32, 8
    n_classes = 10
    feat = n_vars * d_model

    key = jax.random.PRNGKey(0)
    kx, kw, kb, kx2 = jax.random.split(key, 4)

    x = jax.random.normal(kx, (bs, n_vars, d_model, num_patch), dtype=jnp.float32)
    # Deterministic nn.Linear-like init, torch layout [n_classes, feat].
    bound = 1.0 / (feat ** 0.5)
    weight = jax.random.uniform(kw, (n_classes, feat), minval=-bound, maxval=bound,
                                dtype=jnp.float32)
    bias = jax.random.uniform(kb, (n_classes,), minval=-bound, maxval=bound,
                              dtype=jnp.float32)

    w_prepped, b_prepped = prepare_head_params(weight, bias)

    def ref(xa):
        xl = xa[:, :, :, -1].reshape(xa.shape[0], feat)
        r_bf16 = jnp.dot(xl.astype(jnp.bfloat16), weight.T.astype(jnp.bfloat16),
                         preferred_element_type=jnp.float32) + bias
        r_f32 = xl @ weight.T + bias
        return r_bf16, r_f32

    # 1) Default path: fused last-patch select, VMEM-resident weight.
    y = jax.block_until_ready(
        classification_head(x, w_prepped, b_prepped, n_classes=n_classes))
    rb, rf = ref(x)
    assert y.shape == (bs, n_classes)
    assert jnp.allclose(y, rb, atol=2e-3, rtol=2e-3), float(jnp.max(jnp.abs(y - rb)))
    assert jnp.allclose(y, rf, atol=2e-2, rtol=2e-2), float(jnp.max(jnp.abs(y - rf)))

    # 2) Forced K-split: exercises the feat-tiled accumulator (pl.when) path.
    y2 = jax.block_until_ready(
        classification_head(x, w_prepped, b_prepped, n_classes=n_classes, k_split=2))
    assert jnp.allclose(y2, rb, atol=2e-3, rtol=2e-3), float(jnp.max(jnp.abs(y2 - rb)))

    # 3) Batch not a multiple of the tile: partial last tile must be masked.
    bs3 = 20
    x3 = jax.random.normal(kx2, (bs3, n_vars, d_model, num_patch), dtype=jnp.float32)
    y3 = jax.block_until_ready(
        classification_head(x3, w_prepped, b_prepped, n_classes=n_classes,
                            max_rows_per_tile=16))
    rb3, rf3 = ref(x3)
    assert y3.shape == (bs3, n_classes)
    assert jnp.allclose(y3, rb3, atol=2e-3, rtol=2e-3), float(jnp.max(jnp.abs(y3 - rb3)))
    assert jnp.allclose(y3, rf3, atol=2e-2, rtol=2e-2), float(jnp.max(jnp.abs(y3 - rf3)))

    print("KERNEL_OK")
</pallas_src>

<mosaic_0001>
module attributes {stable_mosaic.version = 11 : i64} {
  func.func @kernel(%arg0: i32, %arg1: memref<2x128x8xf32, #tpu.memory_space<vmem>>, %arg2: memref<128x128xbf16, #tpu.memory_space<vmem>>, %arg3: memref<1x128xf32, #tpu.memory_space<vmem>>, %arg4: memref<2x128xf32, #tpu.memory_space<vmem>>) attributes {dimension_semantics = [#tpu.dimension_semantics<parallel>], iteration_bounds = array<i64: 1>, scalar_prefetch = 0 : i64, scratch_operands = 0 : i64, tpu.core_type = #tpu.core_type<tc>, window_params = [{transform_indices = @transform_0, window_bounds = array<i64: 2, 128, 8>}, {pipeline_mode = #tpu.pipeline_mode<synchronous>, transform_indices = @transform_1, window_bounds = array<i64: 128, 128>}, {pipeline_mode = #tpu.pipeline_mode<synchronous>, transform_indices = @transform_2, window_bounds = array<i64: 1, 128>}, {transform_indices = @transform_3, window_bounds = array<i64: 2, 128>}]} {
    %c0 = arith.constant 0 : index
    %c0_0 = arith.constant 0 : index
    %c0_1 = arith.constant 0 : index
    %0 = vector.load %arg1[%c0, %c0_0, %c0_1] : memref<2x128x8xf32, #tpu.memory_space<vmem>>, vector<2x128x8xf32>
    %1 = tpu.iota {dimensions = array<i32: 2>} : vector<2x128x8xi32>
    %c7_i32 = arith.constant 7 : i32
    %2 = vector.broadcast %c7_i32 : i32 to vector<2x128x8xi32>
    %3 = arith.cmpi eq, %1, %2 : vector<2x128x8xi32>
    %cst = arith.constant 0.000000e+00 : f32
    %4 = vector.broadcast %cst : f32 to vector<2x128x8xf32>
    %5 = arith.select %3, %0, %4 : vector<2x128x8xi1>, vector<2x128x8xf32>
    %cst_2 = arith.constant dense<0.000000e+00> : vector<2x128xf32>
    %6 = vector.multi_reduction <add>, %5, %cst_2 [2] : vector<2x128x8xf32> to vector<2x128xf32>
    %7 = arith.truncf %6 : vector<2x128xf32> to vector<2x128xbf16>
    %c0_3 = arith.constant 0 : index
    %c0_4 = arith.constant 0 : index
    %8 = vector.load %arg2[%c0_3, %c0_4] : memref<128x128xbf16, #tpu.memory_space<vmem>>, vector<128x128xbf16>
    %cst_5 = arith.constant dense<0.000000e+00> : vector<2x128xf32>
    %9 = tpu.matmul %7, %8, %cst_5 {dimension_numbers = #tpu.dot_dimension_numbers<[1], [0], [0], [1], [0, 0, 1, 1], [], []>} : vector<2x128xbf16>, vector<128x128xbf16>, vector<2x128xf32> -> vector<2x128xf32>
    %c0_6 = arith.constant 0 : index
    %c0_7 = arith.constant 0 : index
    %10 = vector.load %arg3[%c0_6, %c0_7] : memref<1x128xf32, #tpu.memory_space<vmem>>, vector<1x128xf32>
    %11 = vector.broadcast %10 : vector<1x128xf32> to vector<2x128xf32>
    %12 = arith.addf %9, %11 : vector<2x128xf32>
    %c0_8 = arith.constant 0 : index
    %c0_9 = arith.constant 0 : index
    %13 = vector.load %arg4[%c0_8, %c0_9] : memref<2x128xf32, #tpu.memory_space<vmem>>, vector<2x128xf32>
    tpu.vector_store %arg4[%c0_8, %c0_9], %12 {strides = array<i32>} : memref<2x128xf32, #tpu.memory_space<vmem>>, vector<2x128xf32>,
    return
  }
  func.func @transform_0(%arg0: i32) -> (i32, i32, i32) {
    %c0_i32 = arith.constant 0 : i32
    %c0_i32_0 = arith.constant 0 : i32
    %c0_i32_1 = arith.constant 0 : i32
    return %arg0, %c0_i32, %c0_i32_0 : i32, i32, i32
  }
  func.func @transform_1(%arg0: i32) -> (i32, i32) {
    %c0_i32 = arith.constant 0 : i32
    %c0_i32_0 = arith.constant 0 : i32
    %c0_i32_1 = arith.constant 0 : i32
    return %c0_i32, %c0_i32_0 : i32, i32
  }
  func.func @transform_2(%arg0: i32) -> (i32, i32) {
    %c0_i32 = arith.constant 0 : i32
    %c0_i32_0 = arith.constant 0 : i32
    %c0_i32_1 = arith.constant 0 : i32
    return %c0_i32, %c0_i32_0 : i32, i32
  }
  func.func @transform_3(%arg0: i32) -> (i32, i32) {
    %c0_i32 = arith.constant 0 : i32
    %c0_i32_0 = arith.constant 0 : i32
    return %arg0, %c0_i32 : i32, i32
  }
}

module attributes {stable_mosaic.version = 11 : i64} {
  func.func @kernel(%arg0: i32, %arg1: memref<2x128xbf16, #tpu.memory_space<vmem>>, %arg2: memref<128x128xbf16, #tpu.memory_space<vmem>>, %arg3: memref<1x128xf32, #tpu.memory_space<vmem>>, %arg4: memref<2x128xf32, #tpu.memory_space<vmem>>) attributes {dimension_semantics = [#tpu.dimension_semantics<parallel>], iteration_bounds = array<i64: 1>, scalar_prefetch = 0 : i64, scratch_operands = 0 : i64, tpu.core_type = #tpu.core_type<tc>, window_params = [{transform_indices = @transform_0, window_bounds = array<i64: 2, 128>}, {pipeline_mode = #tpu.pipeline_mode<synchronous>, transform_indices = @transform_1, window_bounds = array<i64: 128, 128>}, {pipeline_mode = #tpu.pipeline_mode<synchronous>, transform_indices = @transform_2, window_bounds = array<i64: 1, 128>}, {transform_indices = @transform_3, window_bounds = array<i64: 2, 128>}]} {
    %c0 = arith.constant 0 : index
    %c0_0 = arith.constant 0 : index
    %0 = vector.load %arg1[%c0, %c0_0] : memref<2x128xbf16, #tpu.memory_space<vmem>>, vector<2x128xbf16>
    %c0_1 = arith.constant 0 : index
    %c0_2 = arith.constant 0 : index
    %1 = vector.load %arg2[%c0_1, %c0_2] : memref<128x128xbf16, #tpu.memory_space<vmem>>, vector<128x128xbf16>
    %cst = arith.constant dense<0.000000e+00> : vector<2x128xf32>
    %2 = tpu.matmul %0, %1, %cst {dimension_numbers = #tpu.dot_dimension_numbers<[1], [0], [0], [1], [0, 0, 1, 1], [], []>} : vector<2x128xbf16>, vector<128x128xbf16>, vector<2x128xf32> -> vector<2x128xf32>
    %c0_3 = arith.constant 0 : index
    %c0_4 = arith.constant 0 : index
    %3 = vector.load %arg3[%c0_3, %c0_4] : memref<1x128xf32, #tpu.memory_space<vmem>>, vector<1x128xf32>
    %4 = vector.broadcast %3 : vector<1x128xf32> to vector<2x128xf32>
    %5 = arith.addf %2, %4 : vector<2x128xf32>
    %c0_5 = arith.constant 0 : index
    %c0_6 = arith.constant 0 : index
    %6 = vector.load %arg4[%c0_5, %c0_6] : memref<2x128xf32, #tpu.memory_space<vmem>>, vector<2x128xf32>
    tpu.vector_store %arg4[%c0_5, %c0_6], %5 {strides = array<i32>} : memref<2x128xf32, #tpu.memory_space<vmem>>, vector<2x128xf32>,
    return
  }
  func.func @transform_0(%arg0: i32) -> (i32, i32) {
    %c0_i32 = arith.constant 0 : i32
    %c0_i32_0 = arith.constant 0 : i32
    return %arg0, %c0_i32 : i32, i32
  }
  func.func @transform_1(%arg0: i32) -> (i32, i32) {
    %c0_i32 = arith.constant 0 : i32
    %c0_i32_0 = arith.constant 0 : i32
    %c0_i32_1 = arith.constant 0 : i32
    return %c0_i32, %c0_i32_0 : i32, i32
  }
  func.func @transform_2(%arg0: i32) -> (i32, i32) {
    %c0_i32 = arith.constant 0 : i32
    %c0_i32_0 = arith.constant 0 : i32
    %c0_i32_1 = arith.constant 0 : i32
    return %c0_i32, %c0_i32_0 : i32, i32
  }
  func.func @transform_3(%arg0: i32) -> (i32, i32) {
    %c0_i32 = arith.constant 0 : i32
    %c0_i32_0 = arith.constant 0 : i32
    return %arg0, %c0_i32 : i32, i32
  }
}

</mosaic_0001>

<llo_original>
// kernel: _forward.1
$region0: #{_forward.1}
  #allocation0 [shape = 'u32[]', space=smem, size = 0x4, offset = 0x4, fixed_abs, tag = 'smem constant byte address 0x4 - core index']
  #allocation1 [shape = 'u32[144,128]{1,0:T(1,128)}', space=vmem, size = 0x12000, scoped, tag = 'internal scratch']
  %s0 = inlined_call_operand.vmem [shape: f32[2,128,8], index: 0, kind: input, shape index: {}]
  %s1 = inlined_call_operand.vmem [shape: bf16[128,128], index: 1, kind: input, shape index: {}]
  %s2 = inlined_call_operand.vmem [shape: f32[1,128], index: 2, kind: input, shape index: {}]
  %s3 = inlined_call_operand.hbm [shape: f32[2,128], index: 3, kind: output, shape index: {}]
  %s4 = sld [smem:[#allocation0]]
  $region22: #{_forward.1} parent=0
    _
  %s6 = ssub.s32 1, %s4
  %s7 = scalar_select 0, %s6, %s4
  $region1: #{_forward.1} parent=0
    #allocation2 [shape = 'u8[1024]{0}', space=vmem, size = 0x400, scoped, tag = 'output window, operand 0, single buffered']
    #allocation3 [shape = 's32[1]{0}', space=sflag, size = 0x4, scoped, tag = 'scoped memory for _forward.1']
    %8 = vsyncpa [#allocation3], 0
    // Predicated region
    $region2: #{_forward.1} parent=1 // pred_check
      _
    $region3: #{_forward.1} parent=1 // pred_check_branch
      %10 = sbr.rel (0) target = $region5
    $region4: #{_forward.1} parent=1 // pred_region
      _
    $region5: #{_forward.1} parent=1 // pred_fallthru
      _
    // Predicated region
    $region6: #{_forward.1} parent=1 // pred_check
      _
    $region7: #{_forward.1} parent=1 // pred_check_branch
      %12 = sbr.rel (0) target = $region9
    $region8: #{_forward.1} parent=1 // pred_region
      _
    $region9: #{_forward.1} parent=1 // pred_fallthru
      _
    // Predicated region
    $region10: #{_forward.1} parent=1 // pred_check
      _
    $region11: #{_forward.1} parent=1 // pred_check_branch
      %14 = sbr.rel (0) target = $region13
    $region12: #{_forward.1} parent=1 // pred_region
      _
    $region13: #{_forward.1} parent=1 // pred_fallthru
      _
    %v16 = vld [vmem:[%s0] sm:$0xff]
    %v17 = vld [vmem:[%s0 + $0x8] sm:$0xff]
    %v18 = vld [vmem:[%s0 + $0x10] sm:$0xff]
    %v19 = vld [vmem:[%s0 + $0x18] sm:$0xff]
    %v20 = vld [vmem:[%s0 + $0x20] sm:$0xff]
    %v21 = vld [vmem:[%s0 + $0x28] sm:$0xff]
    %v22 = vld [vmem:[%s0 + $0x30] sm:$0xff]
    %v23 = vld [vmem:[%s0 + $0x38] sm:$0xff]
    %v24 = vld [vmem:[%s0 + $0x40] sm:$0xff]
    %v25 = vld [vmem:[%s0 + $0x48] sm:$0xff]
    %v26 = vld [vmem:[%s0 + $0x50] sm:$0xff]
    %v27 = vld [vmem:[%s0 + $0x58] sm:$0xff]
    %v28 = vld [vmem:[%s0 + $0x60] sm:$0xff]
    %v29 = vld [vmem:[%s0 + $0x68] sm:$0xff]
    %v30 = vld [vmem:[%s0 + $0x70] sm:$0xff]
    %v31 = vld [vmem:[%s0 + $0x78] sm:$0xff]
    %v32 = vld [vmem:[%s0 + $0x80] sm:$0xff]
    %v33 = vld [vmem:[%s0 + $0x88] sm:$0xff]
    %v34 = vld [vmem:[%s0 + $0x90] sm:$0xff]
    %v35 = vld [vmem:[%s0 + $0x98] sm:$0xff]
    %v36 = vld [vmem:[%s0 + $0xa0] sm:$0xff]
    %v37 = vld [vmem:[%s0 + $0xa8] sm:$0xff]
    %v38 = vld [vmem:[%s0 + $0xb0] sm:$0xff]
    %v39 = vld [vmem:[%s0 + $0xb8] sm:$0xff]
    %v40 = vld [vmem:[%s0 + $0xc0] sm:$0xff]
    %v41 = vld [vmem:[%s0 + $0xc8] sm:$0xff]
    %v42 = vld [vmem:[%s0 + $0xd0] sm:$0xff]
    %v43 = vld [vmem:[%s0 + $0xd8] sm:$0xff]
    %v44 = vld [vmem:[%s0 + $0xe0] sm:$0xff]
    %v45 = vld [vmem:[%s0 + $0xe8] sm:$0xff]
    %v46 = vld [vmem:[%s0 + $0xf0] sm:$0xff]
    %v47 = vld [vmem:[%s0 + $0xf8] sm:$0xff]
    %v48 = vlaneseq
    %v49 = vand.u32 %v48, 127
    %vm50 = vcmp.eq.s32.totalorder %v49, 7
    %v51 = vsel %vm50, %v16, 0.0
    %v52 = vsel %vm50, %v17, 0.0
    %v53 = vsel %vm50, %v18, 0.0
    %v54 = vsel %vm50, %v19, 0.0
    %v55 = vsel %vm50, %v20, 0.0
    %v56 = vsel %vm50, %v21, 0.0
    %v57 = vsel %vm50, %v22, 0.0
    %v58 = vsel %vm50, %v23, 0.0
    %v59 = vsel %vm50, %v24, 0.0
    %v60 = vsel %vm50, %v25, 0.0
    %v61 = vsel %vm50, %v26, 0.0
    %v62 = vsel %vm50, %v27, 0.0
    %v63 = vsel %vm50, %v28, 0.0
    %v64 = vsel %vm50, %v29, 0.0
    %v65 = vsel %vm50, %v30, 0.0
    %v66 = vsel %vm50, %v31, 0.0
    %v67 = vsel %vm50, %v32, 0.0
    %v68 = vsel %vm50, %v33, 0.0
    %v69 = vsel %vm50, %v34, 0.0
    %v70 = vsel %vm50, %v35, 0.0
    %v71 = vsel %vm50, %v36, 0.0
    %v72 = vsel %vm50, %v37, 0.0
    %v73 = vsel %vm50, %v38, 0.0
    %v74 = vsel %vm50, %v39, 0.0
    %v75 = vsel %vm50, %v40, 0.0
    %v76 = vsel %vm50, %v41, 0.0
    %v77 = vsel %vm50, %v42, 0.0
    %v78 = vsel %vm50, %v43, 0.0
    %v79 = vsel %vm50, %v44, 0.0
    %v80 = vsel %vm50, %v45, 0.0
    %v81 = vsel %vm50, %v46, 0.0
    %v82 = vsel %vm50, %v47, 0.0
    %vm83 = vcmask 64512
    %v84 = vsel %vm83, %v51, 0.0
    %85 = vadd.xlane.f32.xlu0 %v84
    %v86 = vpop.xlane.xlu0 %85
    %v87 = vsel %vm83, %v52, 0.0
    %88 = vadd.xlane.f32.xlu0 %v87
    %v89 = vpop.xlane.xlu0 %88
    %v90 = vsel %vm83, %v53, 0.0
    %91 = vadd.xlane.f32.xlu0 %v90
    %v92 = vpop.xlane.xlu0 %91
    %v93 = vsel %vm83, %v54, 0.0
    %94 = vadd.xlane.f32.xlu0 %v93
    %v95 = vpop.xlane.xlu0 %94
    %v96 = vsel %vm83, %v55, 0.0
    %97 = vadd.xlane.f32.xlu0 %v96
    %v98 = vpop.xlane.xlu0 %97
    %v99 = vsel %vm83, %v56, 0.0
    %100 = vadd.xlane.f32.xlu0 %v99
    %v101 = vpop.xlane.xlu0 %100
    %v102 = vsel %vm83, %v57, 0.0
    %103 = vadd.xlane.f32.xlu0 %v102
    %v104 = vpop.xlane.xlu0 %103
    %v105 = vsel %vm83, %v58, 0.0
    %106 = vadd.xlane.f32.xlu0 %v105
    %v107 = vpop.xlane.xlu0 %106
    %v108 = vsel %vm83, %v59, 0.0
    %109 = vadd.xlane.f32.xlu0 %v108
    %v110 = vpop.xlane.xlu0 %109
    %v111 = vsel %vm83, %v60, 0.0
    %112 = vadd.xlane.f32.xlu0 %v111
    %v113 = vpop.xlane.xlu0 %112
    %v114 = vsel %vm83, %v61, 0.0
    %115 = vadd.xlane.f32.xlu0 %v114
    %v116 = vpop.xlane.xlu0 %115
    %v117 = vsel %vm83, %v62, 0.0
    %118 = vadd.xlane.f32.xlu0 %v117
    %v119 = vpop.xlane.xlu0 %118
    %v120 = vsel %vm83, %v63, 0.0
    %121 = vadd.xlane.f32.xlu0 %v120
    %v122 = vpop.xlane.xlu0 %121
    %v123 = vsel %vm83, %v64, 0.0
    %124 = vadd.xlane.f32.xlu0 %v123
    %v125 = vpop.xlane.xlu0 %124
    %v126 = vsel %vm83, %v65, 0.0
    %127 = vadd.xlane.f32.xlu0 %v126
    %v128 = vpop.xlane.xlu0 %127
    %v129 = vsel %vm83, %v66, 0.0
    %130 = vadd.xlane.f32.xlu0 %v129
    %v131 = vpop.xlane.xlu0 %130
    %v132 = vsel %vm83, %v67, 0.0
    %133 = vadd.xlane.f32.xlu0 %v132
    %v134 = vpop.xlane.xlu0 %133
    %v135 = vsel %vm83, %v68, 0.0
    %136 = vadd.xlane.f32.xlu0 %v135
    %v137 = vpop.xlane.xlu0 %136
    %v138 = vsel %vm83, %v69, 0.0
    %139 = vadd.xlane.f32.xlu0 %v138
    %v140 = vpop.xlane.xlu0 %139
    %v141 = vsel %vm83, %v70, 0.0
    %142 = vadd.xlane.f32.xlu0 %v141
    %v143 = vpop.xlane.xlu0 %142
    %v144 = vsel %vm83, %v71, 0.0
    %145 = vadd.xlane.f32.xlu0 %v144
    %v146 = vpop.xlane.xlu0 %145
    %v147 = vsel %vm83, %v72, 0.0
    %148 = vadd.xlane.f32.xlu0 %v147
    %v149 = vpop.xlane.xlu0 %148
    %v150 = vsel %vm83, %v73, 0.0
    %151 = vadd.xlane.f32.xlu0 %v150
    %v152 = vpop.xlane.xlu0 %151
    %v153 = vsel %vm83, %v74, 0.0
    %154 = vadd.xlane.f32.xlu0 %v153
    %v155 = vpop.xlane.xlu0 %154
    %v156 = vsel %vm83, %v75, 0.0
    %157 = vadd.xlane.f32.xlu0 %v156
    %v158 = vpop.xlane.xlu0 %157
    %v159 = vsel %vm83, %v76, 0.0
    %160 = vadd.xlane.f32.xlu0 %v159
    %v161 = vpop.xlane.xlu0 %160
    %v162 = vsel %vm83, %v77, 0.0
    %163 = vadd.xlane.f32.xlu0 %v162
    %v164 = vpop.xlane.xlu0 %163
    %v165 = vsel %vm83, %v78, 0.0
    %166 = vadd.xlane.f32.xlu0 %v165
    %v167 = vpop.xlane.xlu0 %166
    %v168 = vsel %vm83, %v79, 0.0
    %169 = vadd.xlane.f32.xlu0 %v168
    %v170 = vpop.xlane.xlu0 %169
    %v171 = vsel %vm83, %v80, 0.0
    %172 = vadd.xlane.f32.xlu0 %v171
    %v173 = vpop.xlane.xlu0 %172
    %v174 = vsel %vm83, %v81, 0.0
    %175 = vadd.xlane.f32.xlu0 %v174
    %v176 = vpop.xlane.xlu0 %175
    %v177 = vsel %vm83, %v82, 0.0
    %178 = vadd.xlane.f32.xlu0 %v177
    %v179 = vpop.xlane.xlu0 %178
    %v180 = vpack.c.bf16 %v89, %v86
    %v181 = vpack.c.bf16 %v95, %v92
    %v182 = vpack.c.bf16 %v101, %v98
    %v183 = vpack.c.bf16 %v107, %v104
    %v184 = vpack.c.bf16 %v113, %v110
    %v185 = vpack.c.bf16 %v119, %v116
    %v186 = vpack.c.bf16 %v125, %v122
    %v187 = vpack.c.bf16 %v131, %v128
    %v188 = vpack.c.bf16 %v137, %v134
    %v189 = vpack.c.bf16 %v143, %v140
    %v190 = vpack.c.bf16 %v149, %v146
    %v191 = vpack.c.bf16 %v155, %v152
    %v192 = vpack.c.bf16 %v161, %v158
    %v193 = vpack.c.bf16 %v167, %v164
    %v194 = vpack.c.bf16 %v173, %v170
    %v195 = vpack.c.bf16 %v179, %v176
    %v196 = vld [vmem:[%s1] sm:$0xf]
    %v197 = vld [vmem:[%s1 + $0x4] sm:$0xf]
    %v198 = vld [vmem:[%s1 + $0x8] sm:$0xf]
    %v199 = vld [vmem:[%s1 + $0xc] sm:$0xf]
    %v200 = vld [vmem:[%s1 + $0x10] sm:$0xf]
    %v201 = vld [vmem:[%s1 + $0x14] sm:$0xf]
    %v202 = vld [vmem:[%s1 + $0x18] sm:$0xf]
    %v203 = vld [vmem:[%s1 + $0x1c] sm:$0xf]
    %v204 = vld [vmem:[%s1 + $0x20] sm:$0xf]
    %v205 = vld [vmem:[%s1 + $0x24] sm:$0xf]
    %v206 = vld [vmem:[%s1 + $0x28] sm:$0xf]
    %v207 = vld [vmem:[%s1 + $0x2c] sm:$0xf]
    %v208 = vld [vmem:[%s1 + $0x30] sm:$0xf]
    %v209 = vld [vmem:[%s1 + $0x34] sm:$0xf]
    %v210 = vld [vmem:[%s1 + $0x38] sm:$0xf]
    %v211 = vld [vmem:[%s1 + $0x3c] sm:$0xf]
    %v212 = vld [vmem:[%s2] sm:$0x1]
    %v214 = vlaneseq
    %v215 = vshrl.u32 %v214, 7
    %v216 = vsub.s32 0, %v215
    %v217 = vrot.slane %v212, %v216
    %v235 = vunpack.c.l.b16 %v180
    %v236 = vunpack.c.h.b16 %v180
    %v237 = vunpack.c.l.b16 %v181
    %v238 = vunpack.c.h.b16 %v181
    %v239 = vunpack.c.l.b16 %v182
    %v240 = vunpack.c.h.b16 %v182
    %v241 = vunpack.c.l.b16 %v183
    %v242 = vunpack.c.h.b16 %v183
    %v243 = vunpack.c.l.b16 %v184
    %v244 = vunpack.c.h.b16 %v184
    %v245 = vunpack.c.l.b16 %v185
    %v246 = vunpack.c.h.b16 %v185
    %v247 = vunpack.c.l.b16 %v186
    %v248 = vunpack.c.h.b16 %v186
    %v249 = vunpack.c.l.b16 %v187
    %v250 = vunpack.c.h.b16 %v187
    %v251 = vunpack.c.l.b16 %v188
    %v252 = vunpack.c.h.b16 %v188
    %v253 = vunpack.c.l.b16 %v189
    %v254 = vunpack.c.h.b16 %v189
    %v255 = vunpack.c.l.b16 %v190
    %v256 = vunpack.c.h.b16 %v190
    %v257 = vunpack.c.l.b16 %v191
    %v258 = vunpack.c.h.b16 %v191
    %v259 = vunpack.c.l.b16 %v192
    %v260 = vunpack.c.h.b16 %v192
    %v261 = vunpack.c.l.b16 %v193
    %v262 = vunpack.c.h.b16 %v193
    %v263 = vunpack.c.l.b16 %v194
    %v264 = vunpack.c.h.b16 %v194
    %v265 = vunpack.c.l.b16 %v195
    %v266 = vunpack.c.h.b16 %v195
    %v267 = vlaneseq
    %v268 = vshrl.u32 %v267, 7
    %v269 = vsub.s32 %v49, %v268
    %v270 = vrot.slane %v235, %v269
    %v271 = vadd.s32 %v49, 4294967288
    %v272 = vlaneseq
    %v273 = vshrl.u32 %v272, 7
    %v274 = vsub.s32 %v271, %v273
    %v275 = vrot.slane %v236, %v274
    %vm276 = vcmask 130112
    %v277 = vsel %vm276, %v275, %v270
    %v278 = vadd.s32 %v49, 4294967280
    %v279 = vlaneseq
    %v280 = vshrl.u32 %v279, 7
    %v281 = vsub.s32 %v278, %v280
    %v282 = vrot.slane %v237, %v281
    %vm283 = vcmask 195712
    %v284 = vsel %vm283, %v282, %v277
    %v285 = vadd.s32 %v49, 4294967272
    %v286 = vlaneseq
    %v287 = vshrl.u32 %v286, 7
    %v288 = vsub.s32 %v285, %v287
    %v289 = vrot.slane %v238, %v288
    %vm290 = vcmask 261312
    %v291 = vsel %vm290, %v289, %v284
    %v292 = vadd.s32 %v49, 4294967264
    %v293 = vlaneseq
    %v294 = vshrl.u32 %v293, 7
    %v295 = vsub.s32 %v292, %v294
    %v296 = vrot.slane %v239, %v295
    %vm297 = vcmask 326912
    %v298 = vsel %vm297, %v296, %v291
    %v299 = vadd.s32 %v49, 4294967256
    %v300 = vlaneseq
    %v301 = vshrl.u32 %v300, 7
    %v302 = vsub.s32 %v299, %v301
    %v303 = vrot.slane %v240, %v302
    %vm304 = vcmask 392512
    %v305 = vsel %vm304, %v303, %v298
    %v306 = vadd.s32 %v49, 4294967248
    %v307 = vlaneseq
    %v308 = vshrl.u32 %v307, 7
    %v309 = vsub.s32 %v306, %v308
    %v310 = vrot.slane %v241, %v309
    %vm311 = vcmask 458112
    %v312 = vsel %vm311, %v310, %v305
    %v313 = vadd.s32 %v49, 4294967240
    %v314 = vlaneseq
    %v315 = vshrl.u32 %v314, 7
    %v316 = vsub.s32 %v313, %v315
    %v317 = vrot.slane %v242, %v316
    %vm318 = vcmask 523712
    %v319 = vsel %vm318, %v317, %v312
    %v320 = vadd.s32 %v49, 4294967232
    %v321 = vlaneseq
    %v322 = vshrl.u32 %v321, 7
    %v323 = vsub.s32 %v320, %v322
    %v324 = vrot.slane %v243, %v323
    %vm325 = vcmask 589312
    %v326 = vsel %vm325, %v324, %v319
    %v327 = vadd.s32 %v49, 4294967224
    %v328 = vlaneseq
    %v329 = vshrl.u32 %v328, 7
    %v330 = vsub.s32 %v327, %v329
    %v331 = vrot.slane %v244, %v330
    %vm332 = vcmask 654912
    %v333 = vsel %vm332, %v331, %v326
    %v334 = vadd.s32 %v49, 4294967216
    %v335 = vlaneseq
    %v336 = vshrl.u32 %v335, 7
    %v337 = vsub.s32 %v334, %v336
    %v338 = vrot.slane %v245, %v337
    %vm339 = vcmask 720512
    %v340 = vsel %vm339, %v338, %v333
    %v341 = vadd.s32 %v49, 4294967208
    %v342 = vlaneseq
    %v343 = vshrl.u32 %v342, 7
    %v344 = vsub.s32 %v341, %v343
    %v345 = vrot.slane %v246, %v344
    %vm346 = vcmask 786112
    %v347 = vsel %vm346, %v345, %v340
    %v348 = vadd.s32 %v49, 4294967200
    %v349 = vlaneseq
    %v350 = vshrl.u32 %v349, 7
    %v351 = vsub.s32 %v348, %v350
    %v352 = vrot.slane %v247, %v351
    %vm353 = vcmask 851712
    %v354 = vsel %vm353, %v352, %v347
    %v355 = vadd.s32 %v49, 4294967192
    %v356 = vlaneseq
    %v357 = vshrl.u32 %v356, 7
    %v358 = vsub.s32 %v355, %v357
    %v359 = vrot.slane %v248, %v358
    %vm360 = vcmask 917312
    %v361 = vsel %vm360, %v359, %v354
    %v362 = vadd.s32 %v49, 4294967184
    %v363 = vlaneseq
    %v364 = vshrl.u32 %v363, 7
    %v365 = vsub.s32 %v362, %v364
    %v366 = vrot.slane %v249, %v365
    %vm367 = vcmask 982912
    %v368 = vsel %vm367, %v366, %v361
    %v369 = vadd.s32 %v49, 4294967176
    %v370 = vlaneseq
    %v371 = vshrl.u32 %v370, 7
    %v372 = vsub.s32 %v369, %v371
    %v373 = vrot.slane %v250, %v372
    %vm374 = vcmask 1048512
    %v375 = vsel %vm374, %v373, %v368
    %v376 = vlaneseq
    %v377 = vshrl.u32 %v376, 7
    %v378 = vsub.s32 %v49, %v377
    %v379 = vrot.slane %v251, %v378
    %v380 = vlaneseq
    %v381 = vshrl.u32 %v380, 7
    %v382 = vsub.s32 %v271, %v381
    %v383 = vrot.slane %v252, %v382
    %v384 = vsel %vm276, %v383, %v379
    %v385 = vlaneseq
    %v386 = vshrl.u32 %v385, 7
    %v387 = vsub.s32 %v278, %v386
    %v388 = vrot.slane %v253, %v387
    %v389 = vsel %vm283, %v388, %v384
    %v390 = vlaneseq
    %v391 = vshrl.u32 %v390, 7
    %v392 = vsub.s32 %v285, %v391
    %v393 = vrot.slane %v254, %v392
    %v394 = vsel %vm290, %v393, %v389
    %v395 = vlaneseq
    %v396 = vshrl.u32 %v395, 7
    %v397 = vsub.s32 %v292, %v396
    %v398 = vrot.slane %v255, %v397
    %v399 = vsel %vm297, %v398, %v394
    %v400 = vlaneseq
    %v401 = vshrl.u32 %v400, 7
    %v402 = vsub.s32 %v299, %v401
    %v403 = vrot.slane %v256, %v402
    %v404 = vsel %vm304, %v403, %v399
    %v405 = vlaneseq
    %v406 = vshrl.u32 %v405, 7
    %v407 = vsub.s32 %v306, %v406
    %v408 = vrot.slane %v257, %v407
    %v409 = vsel %vm311, %v408, %v404
    %v410 = vlaneseq
    %v411 = vshrl.u32 %v410, 7
    %v412 = vsub.s32 %v313, %v411
    %v413 = vrot.slane %v258, %v412
    %v414 = vsel %vm318, %v413, %v409
    %v415 = vlaneseq
    %v416 = vshrl.u32 %v415, 7
    %v417 = vsub.s32 %v320, %v416
    %v418 = vrot.slane %v259, %v417
    %v419 = vsel %vm325, %v418, %v414
    %v420 = vlaneseq
    %v421 = vshrl.u32 %v420, 7
    %v422 = vsub.s32 %v327, %v421
    %v423 = vrot.slane %v260, %v422
    %v424 = vsel %vm332, %v423, %v419
    %v425 = vlaneseq
    %v426 = vshrl.u32 %v425, 7
    %v427 = vsub.s32 %v334, %v426
    %v428 = vrot.slane %v261, %v427
    %v429 = vsel %vm339, %v428, %v424
    %v430 = vlaneseq
    %v431 = vshrl.u32 %v430, 7
    %v432 = vsub.s32 %v341, %v431
    %v433 = vrot.slane %v262, %v432
    %v434 = vsel %vm346, %v433, %v429
    %v435 = vlaneseq
    %v436 = vshrl.u32 %v435, 7
    %v437 = vsub.s32 %v348, %v436
    %v438 = vrot.slane %v263, %v437
    %v439 = vsel %vm353, %v438, %v434
    %v440 = vlaneseq
    %v441 = vshrl.u32 %v440, 7
    %v442 = vsub.s32 %v355, %v441
    %v443 = vrot.slane %v264, %v442
    %v444 = vsel %vm360, %v443, %v439
    %v445 = vlaneseq
    %v446 = vshrl.u32 %v445, 7
    %v447 = vsub.s32 %v362, %v446
    %v448 = vrot.slane %v265, %v447
    %v449 = vsel %vm367, %v448, %v444
    %v450 = vlaneseq
    %v451 = vshrl.u32 %v450, 7
    %v452 = vsub.s32 %v369, %v451
    %v453 = vrot.slane %v266, %v452
    %v454 = vsel %vm374, %v453, %v449
    %vm455 = vcmask 1041409
    %v456 = vsel %vm455, %v454, %v375
    %v457 = vpack.c.b16 %v456, %v456
    %v475 = vunpack.c.l.b16 %v196
    %v476 = vunpack.c.l.b16 %v197
    %v477 = vunpack.c.l.b16 %v198
    %v478 = vunpack.c.l.b16 %v199
    %v479 = vunpack.c.l.b16 %v200
    %v480 = vunpack.c.l.b16 %v201
    %v481 = vunpack.c.l.b16 %v202
    %v482 = vunpack.c.l.b16 %v203
    %v483 = vunpack.c.l.b16 %v204
    %v484 = vunpack.c.l.b16 %v205
    %v485 = vunpack.c.l.b16 %v206
    %v486 = vunpack.c.l.b16 %v207
    %v487 = vunpack.c.l.b16 %v208
    %v488 = vunpack.c.l.b16 %v209
    %v489 = vunpack.c.l.b16 %v210
    %v490 = vunpack.c.l.b16 %v211
    %v491 = vpack.c.b16 %v476, %v475
    %v492 = vpack.c.b16 %v478, %v477
    %v493 = vpack.c.b16 %v480, %v479
    %v494 = vpack.c.b16 %v482, %v481
    %v495 = vpack.c.b16 %v484, %v483
    %v496 = vpack.c.b16 %v486, %v485
    %v497 = vpack.c.b16 %v488, %v487
    %v498 = vpack.c.b16 %v490, %v489
    %507 = vmatprep.subr.bf16.mxu0 0
    %508 = vmatpush1.bf16.msra.mxu0 %v491
    %509 = vmatprep.subr.bf16.mxu0 0
    %510 = vmatpush1.bf16.msra.mxu0 %v492
    %511 = vmatprep.subr.bf16.mxu0 0
    %512 = vmatpush1.bf16.msra.mxu0 %v493
    %513 = vmatprep.subr.bf16.mxu0 0
    %514 = vmatpush1.bf16.msra.mxu0 %v494
    %515 = vmatprep.subr.bf16.mxu0 0
    %516 = vmatpush1.bf16.msra.mxu0 %v495
    %517 = vmatprep.subr.bf16.mxu0 0
    %518 = vmatpush1.bf16.msra.mxu0 %v496
    %519 = vmatprep.subr.bf16.mxu0 0
    %520 = vmatpush1.bf16.msra.mxu0 %v497
    %521 = vmatprep.subr.bf16.mxu0 0
    %522 = vmatpush1.bf16.msra.mxu0 %v498
    %523 = vmatprep.subr.bf16.mxu0 0
    %524 = vmatpush1.bf16.msra.mxu0 0
    %525 = vmatprep.subr.bf16.mxu0 0
    %526 = vmatpush1.bf16.msra.mxu0 0
    %527 = vmatprep.subr.bf16.mxu0 0
    %528 = vmatpush1.bf16.msra.mxu0 0
    %529 = vmatprep.subr.bf16.mxu0 0
    %530 = vmatpush1.bf16.msra.mxu0 0
    %531 = vmatprep.subr.bf16.mxu0 0
    %532 = vmatpush1.bf16.msra.mxu0 0
    %533 = vmatprep.subr.bf16.mxu0 0
    %534 = vmatpush1.bf16.msra.mxu0 0
    %535 = vmatprep.subr.bf16.mxu0 0
    %536 = vmatpush1.bf16.msra.mxu0 0
    %537 = vmatprep.subr.bf16.mxu0 0
    %538 = vmatpush1.bf16.msra.mxu0 0
    %539 = vmatprep.mubr.bf16.mxu0 0
    %540 = vmatmul.mubr.bf16.gmra.mrb[0].mxu0 %v457
    %v541 = vpop.f32.mrb[0].mxu0
    %v542 = vadd.f32 %v217, %v541
    %v543 = vpop.f32.mrb[0].mxu0
    %v544 = vpop.f32.mrb[0].mxu0
    %v545 = vpop.f32.mrb[0].mxu0
    %546 = vdwg.mxu0
    %547 = vst [vmem:[#allocation2] sm:$0x3] %v542
    // Predicated region
    $region14: #{_forward.1} parent=1 // pred_check
      _
    $region15: #{_forward.1} parent=1 // pred_check_branch
      %549 = sbr.rel (0) target = $region17
    $region16: #{_forward.1} parent=1 // pred_region
      %s551 = ssub.s32 32, 32
      %552 = vsyncadd [#allocation3], %s551
      %s554 = sshll.u32 [#allocation2], 4
      %s555 = int_to_ptr.vmem [resolvable:$true] %s554
      %557 = dma.vmem_to_hbm [thread:$0]  %s555, 32, %s3, [#allocation3]
    $region17: #{_forward.1} parent=1 // pred_fallthru
      _
    // Predicated region
    $region18: #{_forward.1} parent=1 // pred_check
      _
    $region19: #{_forward.1} parent=1 // pred_check_branch
      %559 = sbr.rel (0) target = $region21
    $region20: #{_forward.1} parent=1 // pred_region
      %560 = dma.done [#allocation3], 32
    $region21: #{_forward.1} parent=1 // pred_fallthru
      _
    %561 = vsyncpa [#allocation3], 1

// kernel: _forward.1
$region0: #{_forward.1}
  #allocation0 [shape = 'u32[]', space=smem, size = 0x4, offset = 0x4, fixed_abs, tag = 'smem constant byte address 0x4 - core index']
  #allocation1 [shape = 'u32[144,128]{1,0:T(1,128)}', space=vmem, size = 0x12000, scoped, tag = 'internal scratch']
  %s0 = inlined_call_operand.vmem [shape: bf16[2,128], index: 0, kind: input, shape index: {}]
  %s1 = inlined_call_operand.hbm [shape: bf16[128,128], index: 1, kind: input, shape index: {}]
  %s2 = inlined_call_operand.vmem [shape: f32[1,128], index: 2, kind: input, shape index: {}]
  %s3 = inlined_call_operand.hbm [shape: f32[2,128], index: 3, kind: output, shape index: {}]
  %s4 = sld [smem:[#allocation0]]
  $region26: #{_forward.1} parent=0
    _
  %s6 = ssub.s32 1, %s4
  %s7 = scalar_select 0, %s6, %s4
  $region1: #{_forward.1} parent=0
    #allocation2 [shape = 'u8[32768]{0}', space=vmem, size = 0x8000, scoped, tag = 'input window, operand 1, single buffered']
    #allocation3 [shape = 's32[1]{0}', space=sflag, size = 0x4, scoped, tag = 'scoped memory for _forward.1']
    #allocation4 [shape = 's32[1]{0}', space=sflag, size = 0x4, scoped, tag = 'scoped memory for _forward.1']
    #allocation5 [shape = 'u8[1024]{0}', space=vmem, size = 0x400, scoped, tag = 'output window, operand 0, single buffered']
    %8 = vsyncpa [#allocation3], 0
    %9 = vsyncpa [#allocation4], 0
    // Predicated region
    $region2: #{_forward.1} parent=1 // pred_check
      _
    $region3: #{_forward.1} parent=1 // pred_check_branch
      %11 = sbr.rel (0) target = $region5
    $region4: #{_forward.1} parent=1 // pred_region
      _
    $region5: #{_forward.1} parent=1 // pred_fallthru
      _
    // Predicated region
    $region6: #{_forward.1} parent=1 // pred_check
      _
    $region7: #{_forward.1} parent=1 // pred_check_branch
      %13 = sbr.rel (0) target = $region9
    $region8: #{_forward.1} parent=1 // pred_region
      %s15 = ssub.s32 1024, 1024
      %16 = vsyncadd [#allocation3], %s15
      %s17 = sshll.u32 [#allocation2], 4
      %s18 = int_to_ptr.vmem [resolvable:$true] %s17
      %23 = dma.hbm_to_vmem [thread:$0]  %s1, 1024, %s18, [#allocation3], 64, 64, 4
    $region9: #{_forward.1} parent=1 // pred_fallthru
      _
    // Predicated region
    $region10: #{_forward.1} parent=1 // pred_check
      _
    $region11: #{_forward.1} parent=1 // pred_check_branch
      %25 = sbr.rel (0) target = $region13
    $region12: #{_forward.1} parent=1 // pred_region
      _
    $region13: #{_forward.1} parent=1 // pred_fallthru
      _
    // Predicated region
    $region14: #{_forward.1} parent=1 // pred_check
      _
    $region15: #{_forward.1} parent=1 // pred_check_branch
      %27 = sbr.rel (0) target = $region17
    $region16: #{_forward.1} parent=1 // pred_region
      %28 = dma.done [#allocation3], 1024
    $region17: #{_forward.1} parent=1 // pred_fallthru
      _
    %v30 = vld [vmem:[%s0] sm:$0x1]
    %v31 = vld [vmem:[#allocation2] sm:$0xf]
    %v32 = vld [vmem:[#allocation2 + $0x4] sm:$0xf]
    %v33 = vld [vmem:[#allocation2 + $0x8] sm:$0xf]
    %v34 = vld [vmem:[#allocation2 + $0xc] sm:$0xf]
    %v35 = vld [vmem:[#allocation2 + $0x10] sm:$0xf]
    %v36 = vld [vmem:[#allocation2 + $0x14] sm:$0xf]
    %v37 = vld [vmem:[#allocation2 + $0x18] sm:$0xf]
    %v38 = vld [vmem:[#allocation2 + $0x1c] sm:$0xf]
    %v39 = vld [vmem:[#allocation2 + $0x20] sm:$0xf]
    %v40 = vld [vmem:[#allocation2 + $0x24] sm:$0xf]
    %v41 = vld [vmem:[#allocation2 + $0x28] sm:$0xf]
    %v42 = vld [vmem:[#allocation2 + $0x2c] sm:$0xf]
    %v43 = vld [vmem:[#allocation2 + $0x30] sm:$0xf]
    %v44 = vld [vmem:[#allocation2 + $0x34] sm:$0xf]
    %v45 = vld [vmem:[#allocation2 + $0x38] sm:$0xf]
    %v46 = vld [vmem:[#allocation2 + $0x3c] sm:$0xf]
    %v47 = vld [vmem:[%s2] sm:$0x1]
    %v49 = vlaneseq
    %v50 = vshrl.u32 %v49, 7
    %v51 = vsub.s32 0, %v50
    %v52 = vrot.slane %v47, %v51
    %v70 = vunpack.c.l.b16 %v31
    %v71 = vunpack.c.l.b16 %v32
    %v72 = vunpack.c.l.b16 %v33
    %v73 = vunpack.c.l.b16 %v34
    %v74 = vunpack.c.l.b16 %v35
    %v75 = vunpack.c.l.b16 %v36
    %v76 = vunpack.c.l.b16 %v37
    %v77 = vunpack.c.l.b16 %v38
    %v78 = vunpack.c.l.b16 %v39
    %v79 = vunpack.c.l.b16 %v40
    %v80 = vunpack.c.l.b16 %v41
    %v81 = vunpack.c.l.b16 %v42
    %v82 = vunpack.c.l.b16 %v43
    %v83 = vunpack.c.l.b16 %v44
    %v84 = vunpack.c.l.b16 %v45
    %v85 = vunpack.c.l.b16 %v46
    %v86 = vpack.c.b16 %v71, %v70
    %v87 = vpack.c.b16 %v73, %v72
    %v88 = vpack.c.b16 %v75, %v74
    %v89 = vpack.c.b16 %v77, %v76
    %v90 = vpack.c.b16 %v79, %v78
    %v91 = vpack.c.b16 %v81, %v80
    %v92 = vpack.c.b16 %v83, %v82
    %v93 = vpack.c.b16 %v85, %v84
    %102 = vmatprep.subr.bf16.mxu0 0
    %103 = vmatpush1.bf16.msra.mxu0 %v86
    %104 = vmatprep.subr.bf16.mxu0 0
    %105 = vmatpush1.bf16.msra.mxu0 %v87
    %106 = vmatprep.subr.bf16.mxu0 0
    %107 = vmatpush1.bf16.msra.mxu0 %v88
    %108 = vmatprep.subr.bf16.mxu0 0
    %109 = vmatpush1.bf16.msra.mxu0 %v89
    %110 = vmatprep.subr.bf16.mxu0 0
    %111 = vmatpush1.bf16.msra.mxu0 %v90
    %112 = vmatprep.subr.bf16.mxu0 0
    %113 = vmatpush1.bf16.msra.mxu0 %v91
    %114 = vmatprep.subr.bf16.mxu0 0
    %115 = vmatpush1.bf16.msra.mxu0 %v92
    %116 = vmatprep.subr.bf16.mxu0 0
    %117 = vmatpush1.bf16.msra.mxu0 %v93
    %118 = vmatprep.subr.bf16.mxu0 0
    %119 = vmatpush1.bf16.msra.mxu0 0
    %120 = vmatprep.subr.bf16.mxu0 0
    %121 = vmatpush1.bf16.msra.mxu0 0
    %122 = vmatprep.subr.bf16.mxu0 0
    %123 = vmatpush1.bf16.msra.mxu0 0
    %124 = vmatprep.subr.bf16.mxu0 0
    %125 = vmatpush1.bf16.msra.mxu0 0
    %126 = vmatprep.subr.bf16.mxu0 0
    %127 = vmatpush1.bf16.msra.mxu0 0
    %128 = vmatprep.subr.bf16.mxu0 0
    %129 = vmatpush1.bf16.msra.mxu0 0
    %130 = vmatprep.subr.bf16.mxu0 0
    %131 = vmatpush1.bf16.msra.mxu0 0
    %132 = vmatprep.subr.bf16.mxu0 0
    %133 = vmatpush1.bf16.msra.mxu0 0
    %134 = vmatprep.mubr.bf16.mxu0 0
    %135 = vmatmul.mubr.bf16.gmra.mrb[0].mxu0 %v30
    %v136 = vpop.f32.mrb[0].mxu0
    %v137 = vadd.f32 %v52, %v136
    %v138 = vpop.f32.mrb[0].mxu0
    %v139 = vpop.f32.mrb[0].mxu0
    %v140 = vpop.f32.mrb[0].mxu0
    %141 = vdwg.mxu0
    %142 = vst [vmem:[#allocation5] sm:$0x3] %v137
    // Predicated region
    $region18: #{_forward.1} parent=1 // pred_check
      _
    $region19: #{_forward.1} parent=1 // pred_check_branch
      %144 = sbr.rel (0) target = $region21
    $region20: #{_forward.1} parent=1 // pred_region
      %s146 = ssub.s32 32, 32
      %147 = vsyncadd [#allocation4], %s146
      %s149 = sshll.u32 [#allocation5], 4
      %s150 = int_to_ptr.vmem [resolvable:$true] %s149
      %152 = dma.vmem_to_hbm [thread:$0]  %s150, 32, %s3, [#allocation4]
    $region21: #{_forward.1} parent=1 // pred_fallthru
      _
    // Predicated region
    $region22: #{_forward.1} parent=1 // pred_check
      _
    $region23: #{_forward.1} parent=1 // pred_check_branch
      %154 = sbr.rel (0) target = $region25
    $region24: #{_forward.1} parent=1 // pred_region
      %155 = dma.done [#allocation4], 32
    $region25: #{_forward.1} parent=1 // pred_fallthru
      _
    %156 = vsyncpa [#allocation3], 1
    %157 = vsyncpa [#allocation4], 1

</llo_original>
